<compile_context>
chip_gen: v6e
topology: v6e:2x2x1
jax: 0.10.0
libtpu: 0.0.40
codegen_flags: <defaults>
</compile_context>

<pallas_src>
import functools

import jax
import jax.numpy as jnp
from jax.experimental import pallas as pl
from jax.experimental.pallas import tpu as pltpu


def _round_up(x, m):
    return (x + m - 1) // m * m


# ------------------------- Pallas kernel -------------------------

def _decoder_classifier_kernel(codes_ref, wdec_ref, bdec_ref,
                               w1_ref, b1_ref, w2_ref, b2_ref,
                               logits_ref, *, sigmoid_bf16):
    # Decoder: images = sigmoid(codes @ Wdec + bdec)          -> (tb, IMG_P)
    # codes arrive unpadded f32 (tb, latent); cast to bf16 only for the MXU,
    # accumulate in f32, bias-add in f32.
    codes = codes_ref[...].astype(jnp.bfloat16)
    pre_img = jnp.dot(codes, wdec_ref[...],
                      preferred_element_type=jnp.float32) + bdec_ref[...]
    if sigmoid_bf16:
        # v6e / v7x: bf16 EUP (~2x transcendental throughput); the result feeds
        # the next bf16 matmul anyway, so no extra cast.
        images = jax.nn.sigmoid(pre_img.astype(jnp.bfloat16))
    else:
        # v5e: no bf16 EUP/VPU -> f32 sigmoid, downcast afterwards for the MXU.
        images = jax.nn.sigmoid(pre_img).astype(jnp.bfloat16)

    # Classifier layer 1: h = relu(images @ W1 + b1)          -> (tb, HID_P)
    h = jnp.dot(images, w1_ref[...],
                preferred_element_type=jnp.float32) + b1_ref[...]
    h = jnp.maximum(h, 0.0)

    # Classifier layer 2: logits = h @ W2 + b2                -> (tb, NC_P)
    # Stored as bf16 (lane-dense 128-wide, unmasked vst); f32 recovered outside.
    logits = jnp.dot(h.astype(jnp.bfloat16), w2_ref[...],
                     preferred_element_type=jnp.float32) + b2_ref[...]
    logits_ref[...] = logits.astype(logits_ref.dtype)


# ------------------------- parameter preparation (do ONCE at init) -------------------------

def prepare_params(wdec, bdec, w1, b1, w2, b2):
    """Pad every lane dim up to a multiple of 128 and cast weights to bf16, once.

    Zero-padding keeps the math identical:
      * padded image columns become sigmoid(0+0)=0.5 but hit zero-padded W1 rows,
      * padded hidden columns are relu(0+0)=0 and hit zero-padded W2 rows,
      * padded class columns / batch rows are sliced off by the wrapper.
    The latent (K of the first matmul) dim is deliberately NOT padded — the MXU
    zero-fills short K internally and codes stay unpadded.
    """
    latent, img = wdec.shape
    hidden = w1.shape[1]
    n_classes = w2.shape[1]
    img_p = _round_up(img, 128)
    hid_p = _round_up(hidden, 128)
    nc_p = _round_up(n_classes, 128)

    def pad2(x, rows, cols, dtype):
        r, c = x.shape
        return jnp.pad(x.astype(dtype), ((0, rows - r), (0, cols - c)))

    return {
        "wdec": pad2(wdec, latent, img_p, jnp.bfloat16),
        "bdec": pad2(bdec, 1, img_p, jnp.float32),
        "w1":   pad2(w1, img_p, hid_p, jnp.bfloat16),
        "b1":   pad2(b1, 1, hid_p, jnp.float32),
        "w2":   pad2(w2, hid_p, nc_p, jnp.bfloat16),
        "b2":   pad2(b2, 1, nc_p, jnp.float32),
    }


def default_sigmoid_bf16():
    """bf16 sigmoid on chips with a bf16 EUP (v6e / v7x); f32 on v5e and older."""
    try:
        kind = jax.devices()[0].device_kind.lower()
    except Exception:
        return False
    return not any(v in kind for v in ("v2", "v3", "v4", "v5"))


# ------------------------- batch tiling -------------------------

def _choose_batch_tiling(B, block_b):
    """Pick (tb, padded_B).

    * tb is a multiple of 16 (safe sublane multiple for the bf16 output tile),
    * tb <= block_b, padded_B is a multiple of tb,
    * the grid has >= 2 steps whenever B allows it, so the "parallel" batch axis
      actually shards across v7x's two TensorCores,
    * tb adapts to B so tail padding stays small (no fixed-256 rounding waste).
    """
    sub = 16
    block_b = max(sub, block_b - block_b % sub)
    b_min = _round_up(B, sub)
    if b_min <= sub:
        return sub, sub
    num_tiles = max(2, -(-b_min // block_b))          # >=2 steps, tiles <= block_b
    tb = min(_round_up(-(-b_min // num_tiles), sub), block_b)
    b_p = _round_up(B, tb)
    return tb, b_p


# ------------------------- forward (jitted) -------------------------

@functools.partial(jax.jit, static_argnames=("n_classes", "block_b", "sigmoid_bf16"))
def decoder_classifier_forward(codes, params, *, n_classes,
                               block_b=512, sigmoid_bf16=False):
    """Fused decoder+classifier forward.

    codes  : (B, latent) f32 latent codes
    params : dict from prepare_params() (pre-padded bf16 weights / f32 biases)
    returns: (B, n_classes) f32 logits
    """
    B, latent = codes.shape
    wdec_p, bdec_p = params["wdec"], params["bdec"]
    w1_p, b1_p = params["w1"], params["b1"]
    w2_p, b2_p = params["w2"], params["b2"]
    assert wdec_p.shape[0] == latent, "codes/decoder latent mismatch"
    nc_p = w2_p.shape[1]

    tb, b_p = _choose_batch_tiling(B, block_b)
    codes_p = codes if b_p == B else jnp.pad(codes, ((0, b_p - B), (0, 0)))

    # Weights & biases are fully resident across the batch grid; a single buffer
    # (no double-buffering) avoids a duplicate VMEM copy + duplicate prologue DMA.
    resident = lambda a: pl.BlockSpec(a.shape, lambda i: (0, 0),
                                      pipeline_mode=pl.Buffered(1))

    logits_p = pl.pallas_call(
        functools.partial(_decoder_classifier_kernel, sigmoid_bf16=sigmoid_bf16),
        out_shape=jax.ShapeDtypeStruct((b_p, nc_p), jnp.bfloat16),
        grid=(b_p // tb,),
        in_specs=[
            # codes: batch-tiled, latent dim unpadded (= full array dim -> legal block).
            pl.BlockSpec((tb, latent), lambda i: (i, 0)),
            resident(wdec_p), resident(bdec_p),
            resident(w1_p), resident(b1_p),
            resident(w2_p), resident(b2_p),
        ],
        out_specs=pl.BlockSpec((tb, nc_p), lambda i: (i, 0)),
        compiler_params=pltpu.CompilerParams(
            dimension_semantics=("parallel",)),
    )(codes_p, wdec_p, bdec_p, w1_p, b1_p, w2_p, b2_p)

    return logits_p[:B, :n_classes].astype(jnp.float32)


# ------------------------- reference (pure JAX, f32) -------------------------

def decoder_classifier_ref(codes, wdec, bdec, w1, b1, w2, b2):
    images = jax.nn.sigmoid(codes @ wdec + bdec)
    h = jnp.maximum(images @ w1 + b1, 0.0)
    return h @ w2 + b2


# ------------------------- driver -------------------------

if __name__ == "__main__":
    # Small shapes consistent with the module's forward:
    #   codes (B, latent) -> images (B, C, H, W) flattened -> logits (B, n_classes)
    # B=20 exercises both the multi-step parallel grid (2 tiles of 16) and the
    # batch-tail padding path.
    B, LATENT = 20, 32
    C, H, W = 1, 16, 16
    IMG = C * H * W          # 256 (row-major flattening of the NCHW image)
    HIDDEN = 64
    N_CLASSES = 10

    key = jax.random.PRNGKey(0)
    k_codes, k_wd, k_bd, k_w1, k_b1, k_w2, k_b2 = jax.random.split(key, 7)

    codes = jax.random.normal(k_codes, (B, LATENT), dtype=jnp.float32)

    # Deterministic synthetic parameters (no checkpoint loading).
    wdec = 0.1 * jax.random.normal(k_wd, (LATENT, IMG), dtype=jnp.float32)
    bdec = 0.1 * jax.random.normal(k_bd, (1, IMG), dtype=jnp.float32)
    w1 = 0.1 * jax.random.normal(k_w1, (IMG, HIDDEN), dtype=jnp.float32)
    b1 = 0.1 * jax.random.normal(k_b1, (1, HIDDEN), dtype=jnp.float32)
    w2 = 0.1 * jax.random.normal(k_w2, (HIDDEN, N_CLASSES), dtype=jnp.float32)
    b2 = 0.1 * jax.random.normal(k_b2, (1, N_CLASSES), dtype=jnp.float32)

    # Pad / cast parameters once (model "init" time), then run the jitted forward.
    params = jax.tree_util.tree_map(jax.block_until_ready,
                                    prepare_params(wdec, bdec, w1, b1, w2, b2))
    sig_bf16 = default_sigmoid_bf16()

    logits = decoder_classifier_forward(codes, params, n_classes=N_CLASSES,
                                        block_b=512, sigmoid_bf16=sig_bf16)
    jax.block_until_ready(logits)

    ref = decoder_classifier_ref(codes, wdec, bdec, w1, b1, w2, b2)
    assert logits.shape == (B, N_CLASSES)
    # bf16 matmul operands + bf16 sigmoid (v6e/v7x) + bf16 logits store, all with
    # f32 accumulation -> loosened tolerance vs the f32 reference.
    assert jnp.allclose(logits, ref, atol=7.5e-2, rtol=5e-2), "mismatch vs reference"

    print("KERNEL_OK")
</pallas_src>

<mosaic_0001>
module attributes {stable_mosaic.version = 11 : i64} {
  func.func @_decoder_classifier_kernel(%arg0: i32, %arg1: memref<16x32xf32, #tpu.memory_space<vmem>>, %arg2: memref<32x256xbf16, #tpu.memory_space<vmem>>, %arg3: memref<1x256xf32, #tpu.memory_space<vmem>>, %arg4: memref<256x128xbf16, #tpu.memory_space<vmem>>, %arg5: memref<1x128xf32, #tpu.memory_space<vmem>>, %arg6: memref<128x128xbf16, #tpu.memory_space<vmem>>, %arg7: memref<1x128xf32, #tpu.memory_space<vmem>>, %arg8: memref<16x128xbf16, #tpu.memory_space<vmem>>) attributes {dimension_semantics = [#tpu.dimension_semantics<parallel>], iteration_bounds = array<i64: 2>, scalar_prefetch = 0 : i64, scratch_operands = 0 : i64, tpu.core_type = #tpu.core_type<tc>, window_params = [{transform_indices = @transform_0, window_bounds = array<i64: 16, 32>}, {pipeline_mode = #tpu.pipeline_mode<synchronous>, transform_indices = @transform_1, window_bounds = array<i64: 32, 256>}, {pipeline_mode = #tpu.pipeline_mode<synchronous>, transform_indices = @transform_2, window_bounds = array<i64: 1, 256>}, {pipeline_mode = #tpu.pipeline_mode<synchronous>, transform_indices = @transform_3, window_bounds = array<i64: 256, 128>}, {pipeline_mode = #tpu.pipeline_mode<synchronous>, transform_indices = @transform_4, window_bounds = array<i64: 1, 128>}, {pipeline_mode = #tpu.pipeline_mode<synchronous>, transform_indices = @transform_5, window_bounds = array<i64: 128, 128>}, {pipeline_mode = #tpu.pipeline_mode<synchronous>, transform_indices = @transform_6, window_bounds = array<i64: 1, 128>}, {transform_indices = @transform_7, window_bounds = array<i64: 16, 128>}]} {
    %c0 = arith.constant 0 : index
    %c0_0 = arith.constant 0 : index
    %0 = vector.load %arg1[%c0, %c0_0] : memref<16x32xf32, #tpu.memory_space<vmem>>, vector<16x32xf32>
    %1 = arith.truncf %0 : vector<16x32xf32> to vector<16x32xbf16>
    %c0_1 = arith.constant 0 : index
    %c0_2 = arith.constant 0 : index
    %2 = vector.load %arg2[%c0_1, %c0_2] : memref<32x256xbf16, #tpu.memory_space<vmem>>, vector<32x256xbf16>
    %cst = arith.constant dense<0.000000e+00> : vector<16x256xf32>
    %3 = tpu.matmul %1, %2, %cst {dimension_numbers = #tpu.dot_dimension_numbers<[1], [0], [0], [1], [0, 0, 1, 1], [], []>} : vector<16x32xbf16>, vector<32x256xbf16>, vector<16x256xf32> -> vector<16x256xf32>
    %c0_3 = arith.constant 0 : index
    %c0_4 = arith.constant 0 : index
    %4 = vector.load %arg3[%c0_3, %c0_4] : memref<1x256xf32, #tpu.memory_space<vmem>>, vector<1x256xf32>
    %5 = vector.broadcast %4 : vector<1x256xf32> to vector<16x256xf32>
    %6 = arith.addf %3, %5 : vector<16x256xf32>
    %7 = arith.truncf %6 : vector<16x256xf32> to vector<16x256xbf16>
    %8 = arith.negf %7 : vector<16x256xbf16>
    %9 = math.exp %8 : vector<16x256xbf16>
    %cst_5 = arith.constant 1.000000e+00 : bf16
    %10 = vector.broadcast %cst_5 : bf16 to vector<16x256xbf16>
    %11 = arith.addf %10, %9 : vector<16x256xbf16>
    %12 = arith.divf %10, %11 : vector<16x256xbf16>
    %c0_6 = arith.constant 0 : index
    %c0_7 = arith.constant 0 : index
    %13 = vector.load %arg4[%c0_6, %c0_7] : memref<256x128xbf16, #tpu.memory_space<vmem>>, vector<256x128xbf16>
    %cst_8 = arith.constant dense<0.000000e+00> : vector<16x128xf32>
    %14 = tpu.matmul %12, %13, %cst_8 {dimension_numbers = #tpu.dot_dimension_numbers<[1], [0], [0], [1], [0, 0, 1, 1], [], []>} : vector<16x256xbf16>, vector<256x128xbf16>, vector<16x128xf32> -> vector<16x128xf32>
    %c0_9 = arith.constant 0 : index
    %c0_10 = arith.constant 0 : index
    %15 = vector.load %arg5[%c0_9, %c0_10] : memref<1x128xf32, #tpu.memory_space<vmem>>, vector<1x128xf32>
    %16 = vector.broadcast %15 : vector<1x128xf32> to vector<16x128xf32>
    %17 = arith.addf %14, %16 : vector<16x128xf32>
    %cst_11 = arith.constant 0.000000e+00 : f32
    %18 = vector.broadcast %cst_11 : f32 to vector<16x128xf32>
    %19 = arith.maximumf %17, %18 : vector<16x128xf32>
    %20 = arith.truncf %19 : vector<16x128xf32> to vector<16x128xbf16>
    %c0_12 = arith.constant 0 : index
    %c0_13 = arith.constant 0 : index
    %21 = vector.load %arg6[%c0_12, %c0_13] : memref<128x128xbf16, #tpu.memory_space<vmem>>, vector<128x128xbf16>
    %cst_14 = arith.constant dense<0.000000e+00> : vector<16x128xf32>
    %22 = tpu.matmul %20, %21, %cst_14 {dimension_numbers = #tpu.dot_dimension_numbers<[1], [0], [0], [1], [0, 0, 1, 1], [], []>} : vector<16x128xbf16>, vector<128x128xbf16>, vector<16x128xf32> -> vector<16x128xf32>
    %c0_15 = arith.constant 0 : index
    %c0_16 = arith.constant 0 : index
    %23 = vector.load %arg7[%c0_15, %c0_16] : memref<1x128xf32, #tpu.memory_space<vmem>>, vector<1x128xf32>
    %24 = vector.broadcast %23 : vector<1x128xf32> to vector<16x128xf32>
    %25 = arith.addf %22, %24 : vector<16x128xf32>
    %26 = arith.truncf %25 : vector<16x128xf32> to vector<16x128xbf16>
    %c0_17 = arith.constant 0 : index
    %c0_18 = arith.constant 0 : index
    %27 = vector.load %arg8[%c0_17, %c0_18] : memref<16x128xbf16, #tpu.memory_space<vmem>>, vector<16x128xbf16>
    tpu.vector_store %arg8[%c0_17, %c0_18], %26 {strides = array<i32>} : memref<16x128xbf16, #tpu.memory_space<vmem>>, vector<16x128xbf16>,
    return
  }
  func.func @transform_0(%arg0: i32) -> (i32, i32) {
    %c0_i32 = arith.constant 0 : i32
    %c0_i32_0 = arith.constant 0 : i32
    return %arg0, %c0_i32 : i32, i32
  }
  func.func @transform_1(%arg0: i32) -> (i32, i32) {
    %c0_i32 = arith.constant 0 : i32
    %c0_i32_0 = arith.constant 0 : i32
    %c0_i32_1 = arith.constant 0 : i32
    return %c0_i32, %c0_i32_0 : i32, i32
  }
  func.func @transform_2(%arg0: i32) -> (i32, i32) {
    %c0_i32 = arith.constant 0 : i32
    %c0_i32_0 = arith.constant 0 : i32
    %c0_i32_1 = arith.constant 0 : i32
    return %c0_i32, %c0_i32_0 : i32, i32
  }
  func.func @transform_3(%arg0: i32) -> (i32, i32) {
    %c0_i32 = arith.constant 0 : i32
    %c0_i32_0 = arith.constant 0 : i32
    %c0_i32_1 = arith.constant 0 : i32
    return %c0_i32, %c0_i32_0 : i32, i32
  }
  func.func @transform_4(%arg0: i32) -> (i32, i32) {
    %c0_i32 = arith.constant 0 : i32
    %c0_i32_0 = arith.constant 0 : i32
    %c0_i32_1 = arith.constant 0 : i32
    return %c0_i32, %c0_i32_0 : i32, i32
  }
  func.func @transform_5(%arg0: i32) -> (i32, i32) {
    %c0_i32 = arith.constant 0 : i32
    %c0_i32_0 = arith.constant 0 : i32
    %c0_i32_1 = arith.constant 0 : i32
    return %c0_i32, %c0_i32_0 : i32, i32
  }
  func.func @transform_6(%arg0: i32) -> (i32, i32) {
    %c0_i32 = arith.constant 0 : i32
    %c0_i32_0 = arith.constant 0 : i32
    %c0_i32_1 = arith.constant 0 : i32
    return %c0_i32, %c0_i32_0 : i32, i32
  }
  func.func @transform_7(%arg0: i32) -> (i32, i32) {
    %c0_i32 = arith.constant 0 : i32
    %c0_i32_0 = arith.constant 0 : i32
    return %arg0, %c0_i32 : i32, i32
  }
}

</mosaic_0001>

<llo_original>
// kernel: decoder_classifier_forward.1
$region0: #{decoder_classifier_forward.1}
  #allocation0 [shape = 'u32[]', space=smem, size = 0x4, offset = 0x4, fixed_abs, tag = 'smem constant byte address 0x4 - core index']
  #allocation1 [shape = 'u32[144,128]{1,0:T(1,128)}', space=vmem, size = 0x12000, scoped, tag = 'internal scratch']
  %s0 = inlined_call_operand.vmem [shape: f32[32,32], index: 0, kind: input, shape index: {}]
  %s1 = inlined_call_operand.hbm [shape: bf16[32,256], index: 1, kind: input, shape index: {}]
  %s2 = inlined_call_operand.vmem [shape: f32[1,256], index: 2, kind: input, shape index: {}]
  %s3 = inlined_call_operand.hbm [shape: bf16[256,128], index: 3, kind: input, shape index: {}]
  %s4 = inlined_call_operand.hbm [shape: f32[1,128], index: 4, kind: input, shape index: {}]
  %s5 = inlined_call_operand.vmem [shape: bf16[128,128], index: 5, kind: input, shape index: {}]
  %s6 = inlined_call_operand.hbm [shape: f32[1,128], index: 6, kind: input, shape index: {}]
  %s7 = inlined_call_operand.vmem [shape: bf16[32,128], index: 7, kind: output, shape index: {}]
  %s8 = sld [smem:[#allocation0]]
  $region77: #{decoder_classifier_forward.1} parent=0
    _
  %s10 = ssub.s32 1, %s8
  %s11 = scalar_select 0, %s10, %s8
  $region1: #{decoder_classifier_forward.1} parent=0
    #allocation2 [shape = 'u8[16384]{0}', space=vmem, size = 0x4000, scoped, tag = 'input window, operand 1, single buffered']
    #allocation3 [shape = 's32[2]{0}', space=sflag, size = 0x8, scoped, tag = 'scoped memory for decoder_classifier_forward.1']
    #allocation4 [shape = 'u8[65536]{0}', space=vmem, size = 0x10000, scoped, tag = 'input window, operand 3, single buffered']
    #allocation5 [shape = 's32[1]{0}', space=sflag, size = 0x4, scoped, tag = 'scoped memory for decoder_classifier_forward.1']
    #allocation6 [shape = 'u8[512]{0}', space=vmem, size = 0x400, scoped, tag = 'input window, operand 4, single buffered']
    #allocation7 [shape = 'u8[512]{0}', space=vmem, size = 0x400, scoped, tag = 'input window, operand 6, single buffered']
    #allocation8 [shape = 's32[1]{0}', space=sflag, size = 0x4, scoped, tag = 'scoped memory for decoder_classifier_forward.1']
    %12 = vsyncpa [#allocation3], 0
    %13 = vsyncpa [#allocation5], 0
    %14 = vsyncpa [#allocation8], 0
    loop: start=0, step=1, limit=4
    $region2: #{decoder_classifier_forward.1} parent=1 // loop_pre_header
      _
    $region3: #{decoder_classifier_forward.1} parent=1 // loop_header
      %s16 = sphi 0, %s20
      %p17 = scmp.ge.s32.totalorder %s16, 4
      %s26 = sphi 0, %s28
      %s29 = sphi 0, %s26
      %s30 = sphi 0, %s29
      %s46 = sphi 0, %s30
      %s50 = sphi 0, %s50
      %s52 = sphi 0, %s50
      %s53 = sphi 0, %s52
      %s67 = sphi 0, %s53
      %s71 = sphi 0, %s71
      %s73 = sphi 0, %s71
      %s74 = sphi 0, %s73
      %s88 = sphi 0, %s74
      %s92 = sphi 0, %s92
      %s94 = sphi 0, %s92
      %s95 = sphi 0, %s94
      %s109 = sphi 0, %s95
      %s113 = sphi 0, %s113
      %s115 = sphi 0, %s113
      %s116 = sphi 0, %s115
      %s130 = sphi 0, %s116
      %s134 = sphi 0, %s134
      %s136 = sphi 0, %s134
      %s137 = sphi 0, %s136
      %s151 = sphi 0, %s137
      %s155 = sphi 0, %s155
      %s157 = sphi 0, %s155
      %s158 = sphi 0, %s157
      %s172 = sphi 0, %s158
      %s178 = sphi 0, %s180
      %s181 = sphi 0, %s178
      %s182 = sphi 0, %s181
      %s198 = sphi 0, %s182
    $region4: #{decoder_classifier_forward.1} parent=1 // loop_header_branch
      %19 = sbr.rel (%p17) target = $region8
    $region5: #{decoder_classifier_forward.1} parent=1 // loop_body
      %s21 = ssub.s32 %s16, 1
      %s22 = ssub.s32 %s16, 2
      %s23 = sadd.s32 %s16, 1
      %s24 = ssub.s32 %s16, %s23
      %p25 = scmp.eq.s32.totalorder %s24, 0
      %s27 = sadd.s32 %s26, 1
      %s28 = scalar_select %p25, %s26, %s27
      %p31 = pneg %p25
      %p32 = scmp.eq.s32.totalorder %s16, 1
      %p33 = por %p31, %p32
      %p34 = scmp.ne.s32.totalorder %s26, %s29
      %p35 = scmp.eq.s32.totalorder %s16, 0
      %p36 = por %p34, %p35
      %p37 = scmp.ne.s32.totalorder %s26, %s29
      %p38 = scmp.eq.s32.totalorder %s21, 1
      %p39 = por %p37, %p38
      %p40 = scmp.ne.s32.totalorder %s29, %s30
      %p41 = scmp.eq.s32.totalorder %s21, 0
      %p42 = por %p40, %p41
      %p43 = scmp.ne.s32.totalorder %s29, %s30
      %p44 = scmp.eq.s32.totalorder %s22, 1
      %p45 = por %p43, %p44
      %p47 = scmp.ne.s32.totalorder %s30, %s46
      %p48 = scmp.eq.s32.totalorder %s22, 0
      %p49 = por %p47, %p48
      %s51 = sadd.s32 %s50, 1
      %p54 = scmp.eq.s32.totalorder %s16, 1
      %p55 = scmp.ne.s32.totalorder %s50, %s52
      %p56 = scmp.eq.s32.totalorder %s16, 0
      %p57 = por %p55, %p56
      %p58 = scmp.ne.s32.totalorder %s50, %s52
      %p59 = scmp.eq.s32.totalorder %s21, 1
      %p60 = por %p58, %p59
      %p61 = scmp.ne.s32.totalorder %s52, %s53
      %p62 = scmp.eq.s32.totalorder %s21, 0
      %p63 = por %p61, %p62
      %p64 = scmp.ne.s32.totalorder %s52, %s53
      %p65 = scmp.eq.s32.totalorder %s22, 1
      %p66 = por %p64, %p65
      %p68 = scmp.ne.s32.totalorder %s53, %s67
      %p69 = scmp.eq.s32.totalorder %s22, 0
      %p70 = por %p68, %p69
      %s72 = sadd.s32 %s71, 1
      %p75 = scmp.eq.s32.totalorder %s16, 1
      %p76 = scmp.ne.s32.totalorder %s71, %s73
      %p77 = scmp.eq.s32.totalorder %s16, 0
      %p78 = por %p76, %p77
      %p79 = scmp.ne.s32.totalorder %s71, %s73
      %p80 = scmp.eq.s32.totalorder %s21, 1
      %p81 = por %p79, %p80
      %p82 = scmp.ne.s32.totalorder %s73, %s74
      %p83 = scmp.eq.s32.totalorder %s21, 0
      %p84 = por %p82, %p83
      %p85 = scmp.ne.s32.totalorder %s73, %s74
      %p86 = scmp.eq.s32.totalorder %s22, 1
      %p87 = por %p85, %p86
      %p89 = scmp.ne.s32.totalorder %s74, %s88
      %p90 = scmp.eq.s32.totalorder %s22, 0
      %p91 = por %p89, %p90
      %s93 = sadd.s32 %s92, 1
      %p96 = scmp.eq.s32.totalorder %s16, 1
      %p97 = scmp.ne.s32.totalorder %s92, %s94
      %p98 = scmp.eq.s32.totalorder %s16, 0
      %p99 = por %p97, %p98
      %p100 = scmp.ne.s32.totalorder %s92, %s94
      %p101 = scmp.eq.s32.totalorder %s21, 1
      %p102 = por %p100, %p101
      %p103 = scmp.ne.s32.totalorder %s94, %s95
      %p104 = scmp.eq.s32.totalorder %s21, 0
      %p105 = por %p103, %p104
      %p106 = scmp.ne.s32.totalorder %s94, %s95
      %p107 = scmp.eq.s32.totalorder %s22, 1
      %p108 = por %p106, %p107
      %p110 = scmp.ne.s32.totalorder %s95, %s109
      %p111 = scmp.eq.s32.totalorder %s22, 0
      %p112 = por %p110, %p111
      %s114 = sadd.s32 %s113, 1
      %p117 = scmp.eq.s32.totalorder %s16, 1
      %p118 = scmp.ne.s32.totalorder %s113, %s115
      %p119 = scmp.eq.s32.totalorder %s16, 0
      %p120 = por %p118, %p119
      %p121 = scmp.ne.s32.totalorder %s113, %s115
      %p122 = scmp.eq.s32.totalorder %s21, 1
      %p123 = por %p121, %p122
      %p124 = scmp.ne.s32.totalorder %s115, %s116
      %p125 = scmp.eq.s32.totalorder %s21, 0
      %p126 = por %p124, %p125
      %p127 = scmp.ne.s32.totalorder %s115, %s116
      %p128 = scmp.eq.s32.totalorder %s22, 1
      %p129 = por %p127, %p128
      %p131 = scmp.ne.s32.totalorder %s116, %s130
      %p132 = scmp.eq.s32.totalorder %s22, 0
      %p133 = por %p131, %p132
      %s135 = sadd.s32 %s134, 1
      %p138 = scmp.eq.s32.totalorder %s16, 1
      %p139 = scmp.ne.s32.totalorder %s134, %s136
      %p140 = scmp.eq.s32.totalorder %s16, 0
      %p141 = por %p139, %p140
      %p142 = scmp.ne.s32.totalorder %s134, %s136
      %p143 = scmp.eq.s32.totalorder %s21, 1
      %p144 = por %p142, %p143
      %p145 = scmp.ne.s32.totalorder %s136, %s137
      %p146 = scmp.eq.s32.totalorder %s21, 0
      %p147 = por %p145, %p146
      %p148 = scmp.ne.s32.totalorder %s136, %s137
      %p149 = scmp.eq.s32.totalorder %s22, 1
      %p150 = por %p148, %p149
      %p152 = scmp.ne.s32.totalorder %s137, %s151
      %p153 = scmp.eq.s32.totalorder %s22, 0
      %p154 = por %p152, %p153
      %s156 = sadd.s32 %s155, 1
      %p159 = scmp.eq.s32.totalorder %s16, 1
      %p160 = scmp.ne.s32.totalorder %s155, %s157
      %p161 = scmp.eq.s32.totalorder %s16, 0
      %p162 = por %p160, %p161
      %p163 = scmp.ne.s32.totalorder %s155, %s157
      %p164 = scmp.eq.s32.totalorder %s21, 1
      %p165 = por %p163, %p164
      %p166 = scmp.ne.s32.totalorder %s157, %s158
      %p167 = scmp.eq.s32.totalorder %s21, 0
      %p168 = por %p166, %p167
      %p169 = scmp.ne.s32.totalorder %s157, %s158
      %p170 = scmp.eq.s32.totalorder %s22, 1
      %p171 = por %p169, %p170
      %p173 = scmp.ne.s32.totalorder %s158, %s172
      %p174 = scmp.eq.s32.totalorder %s22, 0
      %p175 = por %p173, %p174
      %s176 = ssub.s32 %s16, %s23
      %p177 = scmp.eq.s32.totalorder %s176, 0
      %s179 = sadd.s32 %s178, 1
      %s180 = scalar_select %p177, %s178, %s179
      %p183 = pneg %p177
      %p184 = scmp.eq.s32.totalorder %s16, 1
      %p185 = por %p183, %p184
      %p186 = scmp.ne.s32.totalorder %s178, %s181
      %p187 = scmp.eq.s32.totalorder %s16, 0
      %p188 = por %p186, %p187
      %p189 = scmp.ne.s32.totalorder %s178, %s181
      %p190 = scmp.eq.s32.totalorder %s21, 1
      %p191 = por %p189, %p190
      %p192 = scmp.ne.s32.totalorder %s181, %s182
      %p193 = scmp.eq.s32.totalorder %s21, 0
      %p194 = por %p192, %p193
      %p195 = scmp.ne.s32.totalorder %s181, %s182
      %p196 = scmp.eq.s32.totalorder %s22, 1
      %p197 = por %p195, %p196
      %p199 = scmp.ne.s32.totalorder %s182, %s198
      %p200 = scmp.eq.s32.totalorder %s22, 0
      %p201 = por %p199, %p200
      %p202 = scmp.le.s32.totalorder 1, %s16
      %p203 = scmp.lt.s32.totalorder %s16, 3
      %p204 = pnand %p202, %p203
      %p205 = pneg %p204
      // Predicated region
      $region9: #{decoder_classifier_forward.1} parent=5 // pred_check
        _
      $region10: #{decoder_classifier_forward.1} parent=5 // pred_check_branch
        %207 = sbr.rel (%p204) target = $region12
      $region11: #{decoder_classifier_forward.1} parent=5 // pred_region
        %s208 = ssub.s32 %s16, 1
        // Predicated region
        $region13: #{decoder_classifier_forward.1} parent=11 // pred_check
          %p209 = pneg %p63
        $region14: #{decoder_classifier_forward.1} parent=11 // pred_check_branch
          %211 = sbr.rel (%p209) target = $region16
        $region15: #{decoder_classifier_forward.1} parent=11 // pred_region
          %s213 = ssub.s32 512, 512
          %214 = vsyncadd [#allocation3], %s213
          %s215 = sshll.u32 [#allocation2], 4
          %s216 = int_to_ptr.vmem [resolvable:$true] %s215
          %221 = dma.hbm_to_vmem [thread:$0]  %s1, 512, %s216, [#allocation3], 128, 128, 8
        $region16: #{decoder_classifier_forward.1} parent=11 // pred_fallthru
          _
        // Predicated region
        $region17: #{decoder_classifier_forward.1} parent=11 // pred_check
          %p222 = pneg %p84
        $region18: #{decoder_classifier_forward.1} parent=11 // pred_check_branch
          %224 = sbr.rel (%p222) target = $region20
        $region19: #{decoder_classifier_forward.1} parent=11 // pred_region
          _
        $region20: #{decoder_classifier_forward.1} parent=11 // pred_fallthru
          _
        // Predicated region
        $region21: #{decoder_classifier_forward.1} parent=11 // pred_check
          %p225 = pneg %p105
        $region22: #{decoder_classifier_forward.1} parent=11 // pred_check_branch
          %227 = sbr.rel (%p225) target = $region24
        $region23: #{decoder_classifier_forward.1} parent=11 // pred_region
          %s229 = ssub.s32 2048, 2048
          %230 = vsyncadd [#allocation5], %s229
          %s231 = sshll.u32 [#allocation4], 4
          %s232 = int_to_ptr.vmem [resolvable:$true] %s231
          %237 = dma.hbm_to_vmem [thread:$0]  %s3, 2048, %s232, [#allocation5], 64, 64, 4
        $region24: #{decoder_classifier_forward.1} parent=11 // pred_fallthru
          _
        // Predicated region
        $region25: #{decoder_classifier_forward.1} parent=11 // pred_check
          %p238 = pneg %p126
        $region26: #{decoder_classifier_forward.1} parent=11 // pred_check_branch
          %240 = sbr.rel (%p238) target = $region28
        $region27: #{decoder_classifier_forward.1} parent=11 // pred_region
          %s242 = ssub.s32 16, 16
          %243 = vsyncadd [#allocation5], %s242
          %s245 = sshll.u32 [#allocation6], 4
          %s246 = int_to_ptr.vmem [resolvable:$true] %s245
          %248 = dma.hbm_to_vmem [thread:$0]  %s4, 16, %s246, [#allocation5]
        $region28: #{decoder_classifier_forward.1} parent=11 // pred_fallthru
          _
        // Predicated region
        $region29: #{decoder_classifier_forward.1} parent=11 // pred_check
          %p249 = pneg %p147
        $region30: #{decoder_classifier_forward.1} parent=11 // pred_check_branch
          %251 = sbr.rel (%p249) target = $region32
        $region31: #{decoder_classifier_forward.1} parent=11 // pred_region
          _
        $region32: #{decoder_classifier_forward.1} parent=11 // pred_fallthru
          _
        // Predicated region
        $region33: #{decoder_classifier_forward.1} parent=11 // pred_check
          %p252 = pneg %p168
        $region34: #{decoder_classifier_forward.1} parent=11 // pred_check_branch
          %254 = sbr.rel (%p252) target = $region36
        $region35: #{decoder_classifier_forward.1} parent=11 // pred_region
          %s256 = ssub.s32 16, 16
          %257 = vsyncadd [#allocation8], %s256
          %s259 = sshll.u32 [#allocation7], 4
          %s260 = int_to_ptr.vmem [resolvable:$true] %s259
          %262 = dma.hbm_to_vmem [thread:$0]  %s6, 16, %s260, [#allocation8]
        $region36: #{decoder_classifier_forward.1} parent=11 // pred_fallthru
          _
      $region12: #{decoder_classifier_forward.1} parent=5 // pred_fallthru
        _
      %p263 = scmp.lt.s32.totalorder %s16, 2
      // Predicated region
      $region37: #{decoder_classifier_forward.1} parent=5 // pred_check
        %p264 = pneg %p263
      $region38: #{decoder_classifier_forward.1} parent=5 // pred_check_branch
        %266 = sbr.rel (%p264) target = $region40
      $region39: #{decoder_classifier_forward.1} parent=5 // pred_region
        // Predicated region
        $region41: #{decoder_classifier_forward.1} parent=39 // pred_check
          %p267 = pneg %p36
        $region42: #{decoder_classifier_forward.1} parent=39 // pred_check_branch
          %269 = sbr.rel (%p267) target = $region44
        $region43: #{decoder_classifier_forward.1} parent=39 // pred_region
          %s270 = smul.u32 2, %s16
          %p271 = scmp.lt.s32.totalorder %s270, 3
          %s272 = scalar_select %p271, %s270, 3
          %s273 = smul.addr %s272, 8
          %s274 = scalar_lea.vmem %s0, %s273
          %s275 = smul.u32 2, %s16
        $region44: #{decoder_classifier_forward.1} parent=39 // pred_fallthru
          _
      $region40: #{decoder_classifier_forward.1} parent=5 // pred_fallthru
        _
      %p276 = scmp.le.s32.totalorder 1, %s16
      %p277 = scmp.lt.s32.totalorder %s16, 3
      %p278 = pnand %p276, %p277
      %p279 = pneg %p278
      // Predicated region
      $region45: #{decoder_classifier_forward.1} parent=5 // pred_check
        _
      $region46: #{decoder_classifier_forward.1} parent=5 // pred_check_branch
        %281 = sbr.rel (%p278) target = $region48
      $region47: #{decoder_classifier_forward.1} parent=5 // pred_region
        %s282 = ssub.s32 %s16, 1
        // Predicated region
        $region49: #{decoder_classifier_forward.1} parent=47 // pred_check
          %p283 = pneg %p63
        $region50: #{decoder_classifier_forward.1} parent=47 // pred_check_branch
          %285 = sbr.rel (%p283) target = $region52
        $region51: #{decoder_classifier_forward.1} parent=47 // pred_region
          %286 = dma.done [#allocation3], 512
        $region52: #{decoder_classifier_forward.1} parent=47 // pred_fallthru
          _
        // Predicated region
        $region53: #{decoder_classifier_forward.1} parent=47 // pred_check
          %p287 = pneg %p105
        $region54: #{decoder_classifier_forward.1} parent=47 // pred_check_branch
          %289 = sbr.rel (%p287) target = $region56
        $region55: #{decoder_classifier_forward.1} parent=47 // pred_region
          %290 = dma.done [#allocation5], 2048
        $region56: #{decoder_classifier_forward.1} parent=47 // pred_fallthru
          _
        // Predicated region
        $region57: #{decoder_classifier_forward.1} parent=47 // pred_check
          %p291 = pneg %p126
        $region58: #{decoder_classifier_forward.1} parent=47 // pred_check_branch
          %293 = sbr.rel (%p291) target = $region60
        $region59: #{decoder_classifier_forward.1} parent=47 // pred_region
          %294 = dma.done [#allocation5], 16
        $region60: #{decoder_classifier_forward.1} parent=47 // pred_fallthru
          _
        // Predicated region
        $region61: #{decoder_classifier_forward.1} parent=47 // pred_check
          %p295 = pneg %p168
        $region62: #{decoder_classifier_forward.1} parent=47 // pred_check_branch
          %297 = sbr.rel (%p295) target = $region64
        $region63: #{decoder_classifier_forward.1} parent=47 // pred_region
          %298 = dma.done [#allocation8], 16
        $region64: #{decoder_classifier_forward.1} parent=47 // pred_fallthru
          _
        %s299 = smul.u32 2, %s21
        %p300 = scmp.lt.s32.totalorder %s299, 3
        %s301 = scalar_select %p300, %s299, 3
        %s302 = smul.addr %s301, 8
        %s303 = scalar_lea.vmem %s0, %s302
        %p304 = pneg %p42
        %p305 = pneg %p39
        %p306 = pneg %p63
        %p307 = pneg %p60
        %p308 = pneg %p84
        %p309 = pneg %p81
        %p310 = pneg %p105
        %p311 = pneg %p102
        %p312 = pneg %p126
        %p313 = pneg %p123
        %p314 = pneg %p147
        %p315 = pneg %p144
        %p316 = pneg %p168
        %p317 = pneg %p165
        %p318 = pneg %p194
        %p319 = pneg %p191
        %s320 = smul.u32 2, %s21
        %p321 = scmp.lt.s32.totalorder %s320, 3
        %s322 = scalar_select %p321, %s320, 3
        %s323 = smul.addr %s322, 4
        %s324 = scalar_lea.vmem %s7, %s323
        %s325 = smul.u32 2, %s21
        %p326 = scmp.lt.s32.totalorder %s325, 3
        %s327 = scalar_select %p326, %s325, 3
        %s328 = smul.addr %s327, 8
        %s329 = scalar_lea.vmem %s0, %s328
        %s330 = smul.u32 2, %s21
        %s331 = smul.u32 2, %s21
        %p332 = scmp.lt.s32.totalorder %s331, 3
        %s333 = scalar_select %p332, %s331, 3
        %s334 = smul.addr %s333, 4
        %s335 = scalar_lea.vmem %s7, %s334
        %s336 = smul.u32 2, %s21
        %v339 = vld [vmem:[%s329] sm:$0xff]
        %v340 = vld [vmem:[%s329 + $0x8] sm:$0xff]
        %v341 = vpack.c.bf16 %v340, %v339
        %v342 = vld [vmem:[#allocation2] sm:$0xff]
        %v343 = vld [vmem:[#allocation2 + $0x8] sm:$0xff]
        %v344 = vld [vmem:[#allocation2 + $0x10] sm:$0xff]
        %v345 = vld [vmem:[#allocation2 + $0x18] sm:$0xff]
        %v346 = vld [vmem:[%s2] sm:$0x3]
        %v348 = vlaneseq
        %v349 = vshrl.u32 %v348, 7
        %v350 = vsub.s32 0, %v349
        %v351 = vrot.slane %v346, %v350
        %v352 = vlaneseq
        %v353 = vshrl.u32 %v352, 7
        %v354 = vsub.s32 1, %v353
        %v355 = vrot.slane %v346, %v354
        %v362 = vunpack.c.l.b16 %v342
        %v363 = vunpack.c.h.b16 %v342
        %v364 = vunpack.c.l.b16 %v343
        %v365 = vunpack.c.h.b16 %v343
        %v366 = vunpack.c.l.b16 %v344
        %v367 = vunpack.c.h.b16 %v344
        %v368 = vunpack.c.l.b16 %v345
        %v369 = vunpack.c.h.b16 %v345
        %v370 = vpack.c.b16 %v364, %v362
        %v371 = vpack.c.b16 %v365, %v363
        %v372 = vpack.c.b16 %v368, %v366
        %v373 = vpack.c.b16 %v369, %v367
        %vm378 = vcmask 261120
        %v380 = vsel %vm378, %v341, 0
        %382 = vmatprep.subr.bf16.mxu0 0
        %383 = vmatpush1.bf16.msra.mxu0 0
        %384 = vmatprep.subr.bf16.mxu0 0
        %385 = vmatpush1.bf16.msra.mxu0 0
        %386 = vmatprep.subr.bf16.mxu0 0
        %387 = vmatpush1.bf16.msra.mxu0 0
        %388 = vmatprep.subr.bf16.mxu0 0
        %389 = vmatpush1.bf16.msra.mxu0 0
        %390 = vmatprep.subr.bf16.mxu0 0
        %391 = vmatpush1.bf16.msra.mxu0 0
        %392 = vmatprep.subr.bf16.mxu0 0
        %393 = vmatpush1.bf16.msra.mxu0 0
        %394 = vmatprep.subr.bf16.mxu0 %v373
        %395 = vmatpush1.bf16.msra.mxu0 %v372
        %396 = vmatprep.subr.bf16.mxu0 %v371
        %397 = vmatpush1.bf16.msra.mxu0 %v370
        %398 = vmatprep.subr.bf16.mxu0 0
        %399 = vmatpush2.bf16.msra.mxu0 0
        %400 = vmatprep.subr.bf16.mxu0 0
        %401 = vmatpush2.bf16.msra.mxu0 0
        %402 = vmatprep.subr.bf16.mxu0 0
        %403 = vmatpush2.bf16.msra.mxu0 0
        %404 = vmatprep.subr.bf16.mxu0 0
        %405 = vmatpush2.bf16.msra.mxu0 0
        %406 = vmatprep.subr.bf16.mxu0 0
        %407 = vmatpush2.bf16.msra.mxu0 0
        %408 = vmatprep.subr.bf16.mxu0 0
        %409 = vmatpush2.bf16.msra.mxu0 0
        %410 = vmatprep.subr.bf16.mxu0 0
        %411 = vmatpush2.bf16.msra.mxu0 0
        %412 = vmatprep.subr.bf16.mxu0 0
        %413 = vmatpush2.bf16.msra.mxu0 0
        %414 = vmatprep.mubr.bf16.mxu0 0
        %415 = vmatmul.mubr.bf16.gmra.mxu0 %v380
        %v416 = vpop.f32.mrf.mxu0
        %v417 = vadd.f32 %v351, %v416
        %v418 = vpop.f32.mrf.mxu0
        %v419 = vadd.f32 %v355, %v418
        %v420 = vpop.f32.mrf.mxu0
        %v421 = vadd.f32 %v351, %v420
        %v422 = vpop.f32.mrf.mxu0
        %v423 = vadd.f32 %v355, %v422
        %424 = vdwg.mxu0
        %v425 = vpack.c.bf16 %v421, %v417
        %v426 = vpack.c.bf16 %v423, %v419
        %v427 = vxor.u32 %v425, 2147516416
        %v428 = vxor.u32 %v426, 2147516416
        %v430 = vmul.bf16 %v427, 1069105081
        %v431 = vpow.bf16.pop %v430
        %v433 = vmul.bf16 %v428, 1069105081
        %v434 = vpow.bf16.pop %v433
        %v435 = vadd.bf16 %v431, 1065369472
        %v436 = vadd.bf16 %v434, 1065369472
        %v437 = vrcp.bf16.pop %v435
        %v438 = vmul.bf16 1065369472, %v437
        %v439 = vrcp.bf16.pop %v436
        %v440 = vmul.bf16 1065369472, %v439
        %v441 = vld [vmem:[#allocation4] sm:$0xf]
        %v442 = vld [vmem:[#allocation4 + $0x4] sm:$0xf]
        %v443 = vld [vmem:[#allocation4 + $0x8] sm:$0xf]
        %v444 = vld [vmem:[#allocation4 + $0xc] sm:$0xf]
        %v445 = vld [vmem:[#allocation4 + $0x10] sm:$0xf]
        %v446 = vld [vmem:[#allocation4 + $0x14] sm:$0xf]
        %v447 = vld [vmem:[#allocation4 + $0x18] sm:$0xf]
        %v448 = vld [vmem:[#allocation4 + $0x1c] sm:$0xf]
        %v449 = vld [vmem:[#allocation4 + $0x20] sm:$0xf]
        %v450 = vld [vmem:[#allocation4 + $0x24] sm:$0xf]
        %v451 = vld [vmem:[#allocation4 + $0x28] sm:$0xf]
        %v452 = vld [vmem:[#allocation4 + $0x2c] sm:$0xf]
        %v453 = vld [vmem:[#allocation4 + $0x30] sm:$0xf]
        %v454 = vld [vmem:[#allocation4 + $0x34] sm:$0xf]
        %v455 = vld [vmem:[#allocation4 + $0x38] sm:$0xf]
        %v456 = vld [vmem:[#allocation4 + $0x3c] sm:$0xf]
        %v457 = vld [vmem:[#allocation4 + $0x40] sm:$0xf]
        %v458 = vld [vmem:[#allocation4 + $0x44] sm:$0xf]
        %v459 = vld [vmem:[#allocation4 + $0x48] sm:$0xf]
        %v460 = vld [vmem:[#allocation4 + $0x4c] sm:$0xf]
        %v461 = vld [vmem:[#allocation4 + $0x50] sm:$0xf]
        %v462 = vld [vmem:[#allocation4 + $0x54] sm:$0xf]
        %v463 = vld [vmem:[#allocation4 + $0x58] sm:$0xf]
        %v464 = vld [vmem:[#allocation4 + $0x5c] sm:$0xf]
        %v465 = vld [vmem:[#allocation4 + $0x60] sm:$0xf]
        %v466 = vld [vmem:[#allocation4 + $0x64] sm:$0xf]
        %v467 = vld [vmem:[#allocation4 + $0x68] sm:$0xf]
        %v468 = vld [vmem:[#allocation4 + $0x6c] sm:$0xf]
        %v469 = vld [vmem:[#allocation4 + $0x70] sm:$0xf]
        %v470 = vld [vmem:[#allocation4 + $0x74] sm:$0xf]
        %v471 = vld [vmem:[#allocation4 + $0x78] sm:$0xf]
        %v472 = vld [vmem:[#allocation4 + $0x7c] sm:$0xf]
        %v473 = vld [vmem:[#allocation6] sm:$0x1]
        %v475 = vlaneseq
        %v476 = vshrl.u32 %v475, 7
        %v477 = vsub.s32 0, %v476
        %v478 = vrot.slane %v473, %v477
        %v512 = vunpack.c.l.b16 %v441
        %v513 = vunpack.c.l.b16 %v442
        %v514 = vunpack.c.l.b16 %v443
        %v515 = vunpack.c.l.b16 %v444
        %v516 = vunpack.c.l.b16 %v445
        %v517 = vunpack.c.l.b16 %v446
        %v518 = vunpack.c.l.b16 %v447
        %v519 = vunpack.c.l.b16 %v448
        %v520 = vunpack.c.l.b16 %v449
        %v521 = vunpack.c.l.b16 %v450
        %v522 = vunpack.c.l.b16 %v451
        %v523 = vunpack.c.l.b16 %v452
        %v524 = vunpack.c.l.b16 %v453
        %v525 = vunpack.c.l.b16 %v454
        %v526 = vunpack.c.l.b16 %v455
        %v527 = vunpack.c.l.b16 %v456
        %v528 = vunpack.c.l.b16 %v457
        %v529 = vunpack.c.l.b16 %v458
        %v530 = vunpack.c.l.b16 %v459
        %v531 = vunpack.c.l.b16 %v460
        %v532 = vunpack.c.l.b16 %v461
        %v533 = vunpack.c.l.b16 %v462
        %v534 = vunpack.c.l.b16 %v463
        %v535 = vunpack.c.l.b16 %v464
        %v536 = vunpack.c.l.b16 %v465
        %v537 = vunpack.c.l.b16 %v466
        %v538 = vunpack.c.l.b16 %v467
        %v539 = vunpack.c.l.b16 %v468
        %v540 = vunpack.c.l.b16 %v469
        %v541 = vunpack.c.l.b16 %v470
        %v542 = vunpack.c.l.b16 %v471
        %v543 = vunpack.c.l.b16 %v472
        %v544 = vpack.c.b16 %v513, %v512
        %v545 = vpack.c.b16 %v515, %v514
        %v546 = vpack.c.b16 %v517, %v516
        %v547 = vpack.c.b16 %v519, %v518
        %v548 = vpack.c.b16 %v521, %v520
        %v549 = vpack.c.b16 %v523, %v522
        %v550 = vpack.c.b16 %v525, %v524
        %v551 = vpack.c.b16 %v527, %v526
        %v552 = vpack.c.b16 %v529, %v528
        %v553 = vpack.c.b16 %v531, %v530
        %v554 = vpack.c.b16 %v533, %v532
        %v555 = vpack.c.b16 %v535, %v534
        %v556 = vpack.c.b16 %v537, %v536
        %v557 = vpack.c.b16 %v539, %v538
        %v558 = vpack.c.b16 %v541, %v540
        %v559 = vpack.c.b16 %v543, %v542
        %576 = vmatprep.subr.bf16.mxu0 0
        %577 = vmatpush1.bf16.msra.mxu0 %v551
        %578 = vmatprep.subr.bf16.mxu0 0
        %579 = vmatpush1.bf16.msra.mxu0 %v550
        %580 = vmatprep.subr.bf16.mxu0 0
        %581 = vmatpush1.bf16.msra.mxu0 %v549
        %582 = vmatprep.subr.bf16.mxu0 0
        %583 = vmatpush1.bf16.msra.mxu0 %v548
        %584 = vmatprep.subr.bf16.mxu0 0
        %585 = vmatpush1.bf16.msra.mxu0 %v547
        %586 = vmatprep.subr.bf16.mxu0 0
        %587 = vmatpush1.bf16.msra.mxu0 %v546
        %588 = vmatprep.subr.bf16.mxu0 0
        %589 = vmatpush1.bf16.msra.mxu0 %v545
        %590 = vmatprep.subr.bf16.mxu0 0
        %591 = vmatpush1.bf16.msra.mxu0 %v544
        %592 = vmatprep.subr.bf16.mxu0 0
        %593 = vmatpush2.bf16.msra.mxu0 %v559
        %594 = vmatprep.subr.bf16.mxu0 0
        %595 = vmatpush2.bf16.msra.mxu0 %v558
        %596 = vmatprep.subr.bf16.mxu0 0
        %597 = vmatpush2.bf16.msra.mxu0 %v557
        %598 = vmatprep.subr.bf16.mxu0 0
        %599 = vmatpush2.bf16.msra.mxu0 %v556
        %600 = vmatprep.subr.bf16.mxu0 0
        %601 = vmatpush2.bf16.msra.mxu0 %v555
        %602 = vmatprep.subr.bf16.mxu0 0
        %603 = vmatpush2.bf16.msra.mxu0 %v554
        %604 = vmatprep.subr.bf16.mxu0 0
        %605 = vmatpush2.bf16.msra.mxu0 %v553
        %606 = vmatprep.subr.bf16.mxu0 0
        %607 = vmatpush2.bf16.msra.mxu0 %v552
        %608 = vmatprep.mubr.bf16.mxu0 %v440
        %609 = vmatmul.mubr.bf16.gmra.mxu0 %v438
        %v610 = vpop.f32.mrf.mxu0
        %v611 = vadd.f32 %v478, %v610
        %v612 = vpop.f32.mrf.mxu0
        %v613 = vpop.f32.mrf.mxu0
        %v614 = vadd.f32 %v478, %v613
        %v615 = vpop.f32.mrf.mxu0
        %616 = vdwg.mxu0
        %v617 = vmax.f32 %v611, 0.0
        %v618 = vmax.f32 %v614, 0.0
        %v619 = vpack.c.bf16 %v618, %v617
        %v620 = vld [vmem:[%s5] sm:$0xf]
        %v621 = vld [vmem:[%s5 + $0x4] sm:$0xf]
        %v622 = vld [vmem:[%s5 + $0x8] sm:$0xf]
        %v623 = vld [vmem:[%s5 + $0xc] sm:$0xf]
        %v624 = vld [vmem:[%s5 + $0x10] sm:$0xf]
        %v625 = vld [vmem:[%s5 + $0x14] sm:$0xf]
        %v626 = vld [vmem:[%s5 + $0x18] sm:$0xf]
        %v627 = vld [vmem:[%s5 + $0x1c] sm:$0xf]
        %v628 = vld [vmem:[%s5 + $0x20] sm:$0xf]
        %v629 = vld [vmem:[%s5 + $0x24] sm:$0xf]
        %v630 = vld [vmem:[%s5 + $0x28] sm:$0xf]
        %v631 = vld [vmem:[%s5 + $0x2c] sm:$0xf]
        %v632 = vld [vmem:[%s5 + $0x30] sm:$0xf]
        %v633 = vld [vmem:[%s5 + $0x34] sm:$0xf]
        %v634 = vld [vmem:[%s5 + $0x38] sm:$0xf]
        %v635 = vld [vmem:[%s5 + $0x3c] sm:$0xf]
        %v636 = vld [vmem:[#allocation7] sm:$0x1]
        %v638 = vlaneseq
        %v639 = vshrl.u32 %v638, 7
        %v640 = vsub.s32 0, %v639
        %v641 = vrot.slane %v636, %v640
        %v659 = vunpack.c.l.b16 %v620
        %v660 = vunpack.c.l.b16 %v621
        %v661 = vunpack.c.l.b16 %v622
        %v662 = vunpack.c.l.b16 %v623
        %v663 = vunpack.c.l.b16 %v624
        %v664 = vunpack.c.l.b16 %v625
        %v665 = vunpack.c.l.b16 %v626
        %v666 = vunpack.c.l.b16 %v627
        %v667 = vunpack.c.l.b16 %v628
        %v668 = vunpack.c.l.b16 %v629
        %v669 = vunpack.c.l.b16 %v630
        %v670 = vunpack.c.l.b16 %v631
        %v671 = vunpack.c.l.b16 %v632
        %v672 = vunpack.c.l.b16 %v633
        %v673 = vunpack.c.l.b16 %v634
        %v674 = vunpack.c.l.b16 %v635
        %v675 = vpack.c.b16 %v660, %v659
        %v676 = vpack.c.b16 %v662, %v661
        %v677 = vpack.c.b16 %v664, %v663
        %v678 = vpack.c.b16 %v666, %v665
        %v679 = vpack.c.b16 %v668, %v667
        %v680 = vpack.c.b16 %v670, %v669
        %v681 = vpack.c.b16 %v672, %v671
        %v682 = vpack.c.b16 %v674, %v673
        %691 = vmatprep.subr.bf16.mxu0 0
        %692 = vmatpush1.bf16.msra.mxu0 %v682
        %693 = vmatprep.subr.bf16.mxu0 0
        %694 = vmatpush1.bf16.msra.mxu0 %v681
        %695 = vmatprep.subr.bf16.mxu0 0
        %696 = vmatpush1.bf16.msra.mxu0 %v680
        %697 = vmatprep.subr.bf16.mxu0 0
        %698 = vmatpush1.bf16.msra.mxu0 %v679
        %699 = vmatprep.subr.bf16.mxu0 0
        %700 = vmatpush1.bf16.msra.mxu0 %v678
        %701 = vmatprep.subr.bf16.mxu0 0
        %702 = vmatpush1.bf16.msra.mxu0 %v677
        %703 = vmatprep.subr.bf16.mxu0 0
        %704 = vmatpush1.bf16.msra.mxu0 %v676
        %705 = vmatprep.subr.bf16.mxu0 0
        %706 = vmatpush1.bf16.msra.mxu0 %v675
        %707 = vmatprep.subr.bf16.mxu0 0
        %708 = vmatpush2.bf16.msra.mxu0 0
        %709 = vmatprep.subr.bf16.mxu0 0
        %710 = vmatpush2.bf16.msra.mxu0 0
        %711 = vmatprep.subr.bf16.mxu0 0
        %712 = vmatpush2.bf16.msra.mxu0 0
        %713 = vmatprep.subr.bf16.mxu0 0
        %714 = vmatpush2.bf16.msra.mxu0 0
        %715 = vmatprep.subr.bf16.mxu0 0
        %716 = vmatpush2.bf16.msra.mxu0 0
        %717 = vmatprep.subr.bf16.mxu0 0
        %718 = vmatpush2.bf16.msra.mxu0 0
        %719 = vmatprep.subr.bf16.mxu0 0
        %720 = vmatpush2.bf16.msra.mxu0 0
        %721 = vmatprep.subr.bf16.mxu0 0
        %722 = vmatpush2.bf16.msra.mxu0 0
        %723 = vmatprep.mubr.bf16.mxu0 0
        %724 = vmatmul.mubr.bf16.gmra.mxu0 %v619
        %v725 = vpop.f32.mrf.mxu0
        %v726 = vadd.f32 %v641, %v725
        %v727 = vpop.f32.mrf.mxu0
        %v728 = vpop.f32.mrf.mxu0
        %v729 = vadd.f32 %v641, %v728
        %v730 = vpop.f32.mrf.mxu0
        %731 = vdwg.mxu0
        %v732 = vpack.c.bf16 %v729, %v726
        %v734 = vunpack.c.l.b16 %v732
        %v735 = vunpack.c.h.b16 %v732
        %v736 = vpack.c.b16 %v734, %v734
        %v737 = vpack.c.b16 %v735, %v735
        %740 = vst [vmem:[%s335] sm:$0xf] %v736
        %741 = vst [vmem:[%s335 + $0x4] sm:$0xf] %v737
        %s742 = smul.u32 2, %s21
        %p743 = scmp.lt.s32.totalorder %s742, 3
        %s744 = scalar_select %p743, %s742, 3
        %s745 = smul.addr %s744, 4
        %s746 = scalar_lea.vmem %s7, %s745
        // Predicated region
        $region65: #{decoder_classifier_forward.1} parent=47 // pred_check
          %p747 = pneg %p191
        $region66: #{decoder_classifier_forward.1} parent=47 // pred_check_branch
          %749 = sbr.rel (%p747) target = $region68
        $region67: #{decoder_classifier_forward.1} parent=47 // pred_region
          %s750 = smul.u32 2, %s21
        $region68: #{decoder_classifier_forward.1} parent=47 // pred_fallthru
          _
      $region48: #{decoder_classifier_forward.1} parent=5 // pred_fallthru
        _
      %p751 = scmp.le.s32.totalorder 2, %s16
      // Predicated region
      $region69: #{decoder_classifier_forward.1} parent=5 // pred_check
        %p752 = pneg %p751
      $region70: #{decoder_classifier_forward.1} parent=5 // pred_check_branch
        %754 = sbr.rel (%p752) target = $region72
      $region71: #{decoder_classifier_forward.1} parent=5 // pred_region
        %s755 = ssub.s32 %s16, 2
        // Predicated region
        $region73: #{decoder_classifier_forward.1} parent=71 // pred_check
          %p756 = pneg %p197
        $region74: #{decoder_classifier_forward.1} parent=71 // pred_check_branch
          %758 = sbr.rel (%p756) target = $region76
        $region75: #{decoder_classifier_forward.1} parent=71 // pred_region
          %s759 = smul.u32 2, %s22
          %p760 = scmp.lt.s32.totalorder %s759, 3
          %s761 = scalar_select %p760, %s759, 3
          %s762 = smul.addr %s761, 4
          %s763 = scalar_lea.vmem %s7, %s762
        $region76: #{decoder_classifier_forward.1} parent=71 // pred_fallthru
          _
      $region72: #{decoder_classifier_forward.1} parent=5 // pred_fallthru
        _
    $region6: #{decoder_classifier_forward.1} parent=1 // loop_footer
      %s20 = sadd.s32 1, %s16
    $region7: #{decoder_classifier_forward.1} parent=1 // loop_footer_branch
      %15 = sbr.rel target = $region3
    $region8: #{decoder_classifier_forward.1} parent=1 // loop_exit
      _
    %764 = vsyncpa [#allocation3], 1
    %s765 = scalar_lea.sflag [#allocation3], 1
    %766 = vsyncpa %s765, 1
    %767 = vsyncpa [#allocation5], 1
    %768 = vsyncpa [#allocation8], 1

</llo_original>
